<compile_context>
chip_gen: v5e
topology: v5e:2x2
jax: 0.10.0
libtpu: 0.0.40
codegen_flags: <defaults>
</compile_context>

<pallas_src>
import functools

import jax
import jax.numpy as jnp
from jax.experimental import pallas as pl
from jax.experimental.pallas import tpu as pltpu


def _round_up(v, m):
    return ((v + m - 1) // m) * m


def _cdiv(a, b):
    return -(-a // b)


def _vmem_block_bytes(rows, cols, dtype):
    """Bytes a (rows, cols) block really occupies in VMEM: rows round up to the sublane
    multiple (8 for 4-byte, 16 for 2-byte dtypes), cols round up to 128 lanes."""
    it = jnp.dtype(dtype).itemsize
    sub = 8 * max(1, 4 // it)
    return _round_up(max(int(rows), 1), sub) * _round_up(max(int(cols), 1), 128) * it


def _largest_aligned_divisor(rows, cap):
    """Largest d with d % 8 == 0, d | rows and d <= cap (None if rows % 8 != 0 / no d)."""
    if rows % 8 != 0:
        return None
    m = rows // 8
    k = min(m, max(1, cap // 8))
    while k >= 1:
        if m % k == 0:
            return 8 * k
        k -= 1
    return None


def _choose_row_tiling(rows, target):
    """Pick (grid_n, tile, exact) for the row axis.

    exact => grid_n * tile == rows: no wrapper-side jnp.pad of x and no out[:R] slice
    (each of those is a full extra HBM pass).  Prefers >= 2 grid steps so the 'parallel'
    axis can shard over both v7x TensorCores; falls back to a single full-height block,
    and only as a last resort to a ragged (padded) tiling.
    """
    rows = int(rows)
    target = max(8, int(target))
    cap = min(target, max(8, rows // 2))            # cap <= rows//2  =>  grid_n >= 2
    tile = _largest_aligned_divisor(rows, cap)
    if tile is not None and rows // tile <= 4 * max(1, _cdiv(rows, target)):
        return rows // tile, tile, True
    if rows <= target:                              # exact single block (block == array rows)
        return 1, rows, True
    grid_n = _cdiv(rows, target)                    # ragged: wrapper pads x / slices output
    return grid_n, _round_up(_cdiv(rows, grid_n), 8), False


def _resident_kernel(x_ref, w0_ref, w1_ref, b_ref, o_ref, *, tap_offset):
    """Fast path: all of (row-packed) x is VMEM-resident via one constant-index block (a
    single HBM read of x); both temporal taps are sliced in-kernel at 8-row-aligned
    dynamic offsets.  Two K-small MXU dots accumulate in f32, then bias + ReLU + store."""
    tile = o_ref.shape[0]
    r0 = pl.multiple_of(pl.program_id(0) * tile, 8)   # tile % 8 == 0 on this path
    r1 = pl.multiple_of(r0 + tap_offset, 8)           # tap_offset % 8 == 0 on this path
    x0 = x_ref[pl.ds(r0, tile), :]
    x1 = x_ref[pl.ds(r1, tile), :]
    acc = jnp.dot(x0, w0_ref[...], preferred_element_type=jnp.float32)
    acc = acc + jnp.dot(x1, w1_ref[...], preferred_element_type=jnp.float32)
    acc = acc + b_ref[...]                             # (1, Lout) broadcasts over rows
    o_ref[...] = jnp.maximum(acc, 0.0).astype(o_ref.dtype)


def _two_input_kernel(x0_ref, x1_ref, w0_ref, w1_ref, b_ref, o_ref):
    """Fallback tile kernel: both taps arrive as separately tiled inputs (used when the tap
    offset is not sublane-aligned or x cannot stay VMEM-resident)."""
    acc = jnp.dot(x0_ref[...], w0_ref[...], preferred_element_type=jnp.float32)
    acc = acc + jnp.dot(x1_ref[...], w1_ref[...], preferred_element_type=jnp.float32)
    acc = acc + b_ref[...]
    o_ref[...] = jnp.maximum(acc, 0.0).astype(o_ref.dtype)


def temporal_conv_layer(x, weight, bias, dia=1, *, row_tile=8192,
                        compute_dtype=jnp.float32, out_dtype=jnp.float32,
                        vmem_cap_bytes=None):
    """x: (T, N, c_in); weight: (c_out, c_in, 2, 1); bias: (c_out,).

    Returns (T - dia, N, c_out) in out_dtype (float32 default == torch semantics).
    compute_dtype=bf16 halves x/W streaming (f32 MXU accumulation kept);
    out_dtype=bf16 halves the (dominant) output writeback traffic.
    """
    T, N, c_in = x.shape
    c_out = weight.shape[0]
    T_out = T - dia
    if T_out <= 0:
        raise ValueError("sequence too short for the given dilation")

    R = T_out * N                  # output rows (t, n)
    D = dia * N                    # second-tap offset in flattened (T*N) rows

    w0 = weight[:, :, 0, 0].T.astype(compute_dtype)    # (c_in, c_out)
    w1 = weight[:, :, 1, 0].T.astype(compute_dtype)
    b = bias.astype(jnp.float32)

    # ---- lane-dense output packing (review: biggest single lever) -------------------
    # G output rows share one 128-lane vector row; achieved purely through a free
    # row-major reshape of x plus block-diagonal weights -> no in-kernel relayout.
    G = 128 // c_out if (0 < c_out < 128 and 128 % c_out == 0) else 1
    if G > 1 and (R % G or D % G or (T * N) % G):
        G = 1

    x_flat = x.astype(compute_dtype).reshape(T * N, c_in)
    if G > 1:
        x_lay = x_flat.reshape((T * N) // G, G * c_in)              # free reshape
        eye = jnp.eye(G, dtype=compute_dtype)
        w0_lay = jnp.kron(eye, w0)                                   # (G*c_in, 128) blockdiag
        w1_lay = jnp.kron(eye, w1)
        b_lay = jnp.tile(b, G).reshape(1, G * c_out)
    else:
        x_lay, w0_lay, w1_lay = x_flat, w0, w1
        b_lay = b.reshape(1, c_out)

    Rr, Dr = R // G, D // G        # rows / tap offset in packed-layout units
    Kin, Lout = x_lay.shape[1], w0_lay.shape[1]

    grid_n, tile, exact = _choose_row_tiling(Rr, max(8, row_tile // G))
    Rr_pad = grid_n * tile         # == Rr when exact

    # ---- (8,128)-padded VMEM sizing; per-generation capacity ------------------------
    if vmem_cap_bytes is None:
        vmem_cap_bytes = 64 * 1024 * 1024               # conservative: v7x per-TC VMEM
        try:
            vmem_cap_bytes = int(pltpu.get_tpu_info().vmem_capacity_bytes)
        except Exception:                               # keep the safe default
            pass
    vmem_cap_bytes = max(32 * 1024 * 1024, min(int(vmem_cap_bytes), 128 * 1024 * 1024))

    sub = 8 * max(1, 4 // jnp.dtype(compute_dtype).itemsize)
    w_bytes = (2 * _vmem_block_bytes(Kin, Lout, compute_dtype)
               + _vmem_block_bytes(1, Lout, jnp.float32))
    out_tile_bytes = _vmem_block_bytes(tile, Lout, out_dtype)
    resident_bytes = _vmem_block_bytes(Rr_pad + Dr, Kin, compute_dtype)
    # NOTE: Pallas double-buffers every BlockSpec input by default, even with a constant
    # index_map.  pl.Buffered(1) (review suggestion) would halve the resident term; we keep
    # the verified default pipelining and charge the 2x explicitly here instead.
    need_resident = 2 * resident_bytes + 2 * w_bytes + 2 * out_tile_bytes + (1 << 20)
    need_tiled = (4 * _vmem_block_bytes(tile, Kin, compute_dtype)
                  + 2 * w_bytes + 2 * out_tile_bytes + (1 << 20))

    aligned = (tile % sub == 0) and (Dr % sub == 0)
    use_resident = aligned and need_resident <= int(0.85 * vmem_cap_bytes)
    need = need_resident if use_resident else need_tiled
    vmem_limit = int(min(vmem_cap_bytes, max(32 * 1024 * 1024, need + (4 << 20))))

    out_shape = jax.ShapeDtypeStruct((Rr_pad, Lout), out_dtype)
    out_spec = pl.BlockSpec((tile, Lout), lambda i: (i, 0))
    w_spec = pl.BlockSpec((Kin, Lout), lambda i: (0, 0))
    b_spec = pl.BlockSpec((1, Lout), lambda i: (0, 0))
    cparams = pltpu.CompilerParams(dimension_semantics=("parallel",),
                                   vmem_limit_bytes=vmem_limit)

    if use_resident:
        # x is read from HBM exactly once: one constant-index block holds all of (packed) x.
        x_res = x_lay
        pad = (Rr_pad + Dr) - x_lay.shape[0]
        if pad > 0:                      # only on the (rare) ragged tiling
            x_res = jnp.pad(x_lay, ((0, pad), (0, 0)))
        out = pl.pallas_call(
            functools.partial(_resident_kernel, tap_offset=Dr),
            out_shape=out_shape,
            grid_spec=pltpu.PrefetchScalarGridSpec(
                num_scalar_prefetch=0,
                grid=(grid_n,),
                in_specs=[pl.BlockSpec((x_res.shape[0], Kin), lambda i: (0, 0)),
                          w_spec, w_spec, b_spec],
                out_specs=out_spec,
            ),
            compiler_params=cparams,
        )(x_res, w0_lay, w1_lay, b_lay)
    else:
        # TODO(synk): stream an overlapping (tile + Dr)-row window with a manual
        # double-buffered DMA (memory_space=pl.ANY + pltpu.make_async_copy) so the shifted
        # tap slice below is not materialized for huge / sublane-misaligned x.
        x0s = x_lay[:Rr]
        x1s = x_lay[Dr:Dr + Rr]
        if Rr_pad > Rr:
            x0s = jnp.pad(x0s, ((0, Rr_pad - Rr), (0, 0)))
            x1s = jnp.pad(x1s, ((0, Rr_pad - Rr), (0, 0)))
        x_spec = pl.BlockSpec((tile, Kin), lambda i: (i, 0))
        out = pl.pallas_call(
            _two_input_kernel,
            out_shape=out_shape,
            grid_spec=pltpu.PrefetchScalarGridSpec(
                num_scalar_prefetch=0,
                grid=(grid_n,),
                in_specs=[x_spec, x_spec, w_spec, w_spec, b_spec],
                out_specs=out_spec,
            ),
            compiler_params=cparams,
        )(x0s, x1s, w0_lay, w1_lay, b_lay)

    if Rr_pad > Rr:
        out = out[:Rr]
    # Free, bit-identical reshapes: (Rr, Lout) row-major == (R, c_out) row-major.
    return out.reshape(T_out, N, c_out)


def temporal_conv_reference(x, weight, bias, dia=1):
    """Pure-JAX reference of the PyTorch forward for validation."""
    x = x.astype(jnp.float32)
    T_out = x.shape[0] - dia
    w0 = weight[:, :, 0, 0].astype(jnp.float32)   # (c_out, c_in)
    w1 = weight[:, :, 1, 0].astype(jnp.float32)
    hi = jax.lax.Precision.HIGHEST
    y = (jnp.einsum('tnc,oc->tno', x[:T_out], w0, precision=hi)
         + jnp.einsum('tnc,oc->tno', x[dia:dia + T_out], w1, precision=hi)
         + bias.astype(jnp.float32))
    return jnp.maximum(y, 0.0)


if __name__ == "__main__":
    key = jax.random.PRNGKey(0)

    def make_inputs(k, T, N, c_in, c_out):
        kx, kw, kb = jax.random.split(k, 3)
        xx = jax.random.normal(kx, (T, N, c_in), dtype=jnp.float32)
        bound = 1.0 / ((c_in * 2) ** 0.5)
        ww = jax.random.uniform(kw, (c_out, c_in, 2, 1), jnp.float32,
                                minval=-bound, maxval=bound)
        bb = jax.random.uniform(kb, (c_out,), jnp.float32, minval=-bound, maxval=bound)
        return xx, ww, bb

    cases = [
        # (T, N, c_in, c_out, dia, kwargs)        -- code path exercised
        (9, 32, 4, 32, 1, {}),                    # packed (G=4), resident x, 2 parallel steps
        (12, 16, 4, 32, 2, dict(row_tile=64)),    # packed, dia=2, resident x, 5 steps
        (9, 16, 4, 48, 1, {}),                    # generic layout (c_out !| 128), resident x
        (9, 12, 4, 32, 1, {}),                    # packed but misaligned tap -> two-input path
        (10, 10, 5, 32, 1, dict(row_tile=32)),    # ragged tiling (padded) two-input path
    ]
    keys = jax.random.split(key, len(cases))
    for idx, (T, N, c_in, c_out, dia, kw) in enumerate(cases):
        xx, ww, bb = make_inputs(keys[idx], T, N, c_in, c_out)
        fn = jax.jit(functools.partial(temporal_conv_layer, dia=dia, **kw))
        y = jax.block_until_ready(fn(xx, ww, bb))
        y_ref = temporal_conv_reference(xx, ww, bb, dia=dia)
        assert y.shape == (T - dia, N, c_out), (idx, y.shape)
        assert jnp.allclose(y, y_ref, atol=1e-5, rtol=1e-5), f"case {idx}: mismatch vs reference"
    print("KERNEL_OK")
</pallas_src>

<mosaic_0001>
module attributes {stable_mosaic.version = 11 : i64} {
  func.func @_resident_kernel(%arg0: i32, %arg1: memref<72x16xf32, #tpu.memory_space<vmem>>, %arg2: memref<16x128xf32, #tpu.memory_space<vmem>>, %arg3: memref<16x128xf32, #tpu.memory_space<vmem>>, %arg4: memref<1x128xf32, #tpu.memory_space<vmem>>, %arg5: memref<32x128xf32, #tpu.memory_space<vmem>>) attributes {dimension_semantics = [#tpu.dimension_semantics<parallel>], iteration_bounds = array<i64: 2>, scalar_prefetch = 0 : i64, scratch_operands = 0 : i64, tpu.core_type = #tpu.core_type<tc>, window_params = [{pipeline_mode = #tpu.pipeline_mode<synchronous>, transform_indices = @transform_0, window_bounds = array<i64: 72, 16>}, {pipeline_mode = #tpu.pipeline_mode<synchronous>, transform_indices = @transform_1, window_bounds = array<i64: 16, 128>}, {pipeline_mode = #tpu.pipeline_mode<synchronous>, transform_indices = @transform_2, window_bounds = array<i64: 16, 128>}, {pipeline_mode = #tpu.pipeline_mode<synchronous>, transform_indices = @transform_3, window_bounds = array<i64: 1, 128>}, {transform_indices = @transform_4, window_bounds = array<i64: 32, 128>}]} {
    %c32_i32 = arith.constant 32 : i32
    %0 = arith.muli %arg0, %c32_i32 : i32
    %1 = tpu.assume_multiple %0, 8 : i32
    %c8_i32 = arith.constant 8 : i32
    %2 = arith.addi %1, %c8_i32 : i32
    %3 = tpu.assume_multiple %2, 8 : i32
    %4 = arith.index_cast %1 : i32 to index
    %c0 = arith.constant 0 : index
    %5 = vector.load %arg1[%4, %c0] : memref<72x16xf32, #tpu.memory_space<vmem>>, vector<32x16xf32>
    %6 = arith.index_cast %3 : i32 to index
    %c0_0 = arith.constant 0 : index
    %7 = vector.load %arg1[%6, %c0_0] : memref<72x16xf32, #tpu.memory_space<vmem>>, vector<32x16xf32>
    %c0_1 = arith.constant 0 : index
    %c0_2 = arith.constant 0 : index
    %8 = vector.load %arg2[%c0_1, %c0_2] : memref<16x128xf32, #tpu.memory_space<vmem>>, vector<16x128xf32>
    %cst = arith.constant dense<0.000000e+00> : vector<32x128xf32>
    %9 = tpu.matmul %5, %8, %cst {dimension_numbers = #tpu.dot_dimension_numbers<[1], [0], [0], [1], [0, 0, 1, 1], [], []>} : vector<32x16xf32>, vector<16x128xf32>, vector<32x128xf32> -> vector<32x128xf32>
    %c0_3 = arith.constant 0 : index
    %c0_4 = arith.constant 0 : index
    %10 = vector.load %arg3[%c0_3, %c0_4] : memref<16x128xf32, #tpu.memory_space<vmem>>, vector<16x128xf32>
    %cst_5 = arith.constant dense<0.000000e+00> : vector<32x128xf32>
    %11 = tpu.matmul %7, %10, %cst_5 {dimension_numbers = #tpu.dot_dimension_numbers<[1], [0], [0], [1], [0, 0, 1, 1], [], []>} : vector<32x16xf32>, vector<16x128xf32>, vector<32x128xf32> -> vector<32x128xf32>
    %12 = arith.addf %9, %11 : vector<32x128xf32>
    %c0_6 = arith.constant 0 : index
    %c0_7 = arith.constant 0 : index
    %13 = vector.load %arg4[%c0_6, %c0_7] : memref<1x128xf32, #tpu.memory_space<vmem>>, vector<1x128xf32>
    %14 = vector.broadcast %13 : vector<1x128xf32> to vector<32x128xf32>
    %15 = arith.addf %12, %14 : vector<32x128xf32>
    %cst_8 = arith.constant 0.000000e+00 : f32
    %16 = vector.broadcast %cst_8 : f32 to vector<32x128xf32>
    %17 = arith.maximumf %15, %16 : vector<32x128xf32>
    %c0_9 = arith.constant 0 : index
    %c0_10 = arith.constant 0 : index
    %18 = vector.load %arg5[%c0_9, %c0_10] : memref<32x128xf32, #tpu.memory_space<vmem>>, vector<32x128xf32>
    tpu.vector_store %arg5[%c0_9, %c0_10], %17 {strides = array<i32>} : memref<32x128xf32, #tpu.memory_space<vmem>>, vector<32x128xf32>,
    return
  }
  func.func @transform_0(%arg0: i32) -> (i32, i32) {
    %c0_i32 = arith.constant 0 : i32
    %c0_i32_0 = arith.constant 0 : i32
    %c0_i32_1 = arith.constant 0 : i32
    return %c0_i32, %c0_i32_0 : i32, i32
  }
  func.func @transform_1(%arg0: i32) -> (i32, i32) {
    %c0_i32 = arith.constant 0 : i32
    %c0_i32_0 = arith.constant 0 : i32
    %c0_i32_1 = arith.constant 0 : i32
    return %c0_i32, %c0_i32_0 : i32, i32
  }
  func.func @transform_2(%arg0: i32) -> (i32, i32) {
    %c0_i32 = arith.constant 0 : i32
    %c0_i32_0 = arith.constant 0 : i32
    %c0_i32_1 = arith.constant 0 : i32
    return %c0_i32, %c0_i32_0 : i32, i32
  }
  func.func @transform_3(%arg0: i32) -> (i32, i32) {
    %c0_i32 = arith.constant 0 : i32
    %c0_i32_0 = arith.constant 0 : i32
    %c0_i32_1 = arith.constant 0 : i32
    return %c0_i32, %c0_i32_0 : i32, i32
  }
  func.func @transform_4(%arg0: i32) -> (i32, i32) {
    %c0_i32 = arith.constant 0 : i32
    %c0_i32_0 = arith.constant 0 : i32
    return %arg0, %c0_i32 : i32, i32
  }
}

</mosaic_0001>

<llo_original>
// kernel: tile.8
$region0: #{tile.8}
  #allocation0 [shape = 's32[1]{0}', space=sflag, size = 0x4, scoped, tag = 'scoped memory for tile.8']
  %s0 = inlined_call_operand.vmem [shape: f32[32], index: 0, kind: input, shape index: {}]
  %s1 = inlined_call_operand.vmem [shape: f32[4,32], index: 1, kind: output, shape index: {}]
  // Predicated region
  $region2: #{tile.8} parent=0 // pred_check
    _
  $region3: #{tile.8} parent=0 // pred_check_branch
    %3 = sbr.rel (0) target = $region5
  $region4: #{tile.8} parent=0 // pred_region
    _
  $region5: #{tile.8} parent=0 // pred_fallthru
    _
  %v4 = vld [vmem:[%s0] ss:$0 sm:$0xff]
  %5 = vst [vmem:[%s1] sm:$0xf] %v4

// kernel: tile.9
$region0: #{tile.9}
  %s0 = inlined_call_operand.vmem [shape: f32[4,32], index: 0, kind: input, shape index: {}]
  %s1 = inlined_call_operand.vmem [shape: f32[1,128], index: 1, kind: output, shape index: {}]
  $region1: #{tile.9} parent=0
    #allocation0 [shape = 'u8[4096]{0}', space=vmem, size = 0x1000, scoped, tag = 'scoped mem for output reshape']
    #allocation1 [shape = 'u8[4096]{0}', space=vmem, size = 0x1000, scoped, tag = 'scoped mem for input reshape']
    %s3 = ssub.s32 16, 1
    %v4 = vld [vmem:[%s0] sm:%s3]
    %5 = vst [vmem:[#allocation1] sm:%s3] %v4
    %v6 = vld [vmem:[#allocation1] sm:$0x1]
    %vm7 = vcmask 261120
    %8 = vst.msk [vmem:[#allocation0] sm:$0x1] %vm7, %v6
    %s9 = scalar_lea.vmem [#allocation1], 3
    %v10 = vld [vmem:[%s9] sm:$0x1]
    %11 = vrot.lane.b32.xlu0 %v10, 96
    %v12 = vpop.permute.xlu0 %11
    %vm13 = vcmask 1048320
    %14 = vst.msk [vmem:[#allocation0] sm:$0x1] %vm13, %v12
    %s15 = scalar_lea.vmem [#allocation1], 2
    %v16 = vld [vmem:[%s15] sm:$0x1]
    %17 = vrot.lane.b32.xlu0 %v16, 64
    %v18 = vpop.permute.xlu0 %17
    %vm19 = vcmask 785920
    %20 = vst.msk [vmem:[#allocation0] sm:$0x1] %vm19, %v18
    %s21 = scalar_lea.vmem [#allocation1], 1
    %v22 = vld [vmem:[%s21] sm:$0x1]
    %23 = vrot.lane.b32.xlu0 %v22, 32
    %v24 = vpop.permute.xlu0 %23
    %vm25 = vcmask 523520
    %26 = vst.msk [vmem:[#allocation0] sm:$0x1] %vm25, %v24
    %s28 = ssub.s32 2, 1
    %v29 = vld [vmem:[#allocation0] sm:%s28]
    %s31 = ssub.s32 2, 1
    %32 = vst [vmem:[%s1] sm:%s31] %v29

// kernel: temporal_conv_layer.1
$region0: #{temporal_conv_layer.1}
  #allocation0 [shape = 'u32[]', space=smem, size = 0x4, offset = 0x4, fixed_abs, tag = 'smem constant byte address 0x4 - core index']
  #allocation1 [shape = 'u32[72,128]{1,0:T(1,128)}', space=vmem, size = 0x9000, scoped, tag = 'internal scratch']
  %s0 = inlined_call_operand.vmem [shape: f32[72,16], index: 0, kind: input, shape index: {}]
  %s1 = inlined_call_operand.vmem [shape: f32[16,128], index: 1, kind: input, shape index: {}]
  %s2 = inlined_call_operand.vmem [shape: f32[16,128], index: 2, kind: input, shape index: {}]
  %s3 = inlined_call_operand.vmem [shape: f32[1,128], index: 3, kind: input, shape index: {}]
  %s4 = inlined_call_operand.vmem [shape: f32[64,128], index: 4, kind: output, shape index: {}]
  %s5 = sld [smem:[#allocation0]]
  $region49: #{temporal_conv_layer.1} parent=0
    _
  %s7 = ssub.s32 1, %s5
  %s8 = scalar_select 0, %s7, %s5
  loop: start=0, step=1, limit=4
  $region2: #{temporal_conv_layer.1} parent=0 // loop_pre_header
    _
  $region3: #{temporal_conv_layer.1} parent=0 // loop_header
    %s10 = sphi 0, %s14
    %p11 = scmp.ge.s32.totalorder %s10, 4
    %s18 = sphi 0, %s18
    %s20 = sphi 0, %s18
    %s21 = sphi 0, %s20
    %s35 = sphi 0, %s21
    %s39 = sphi 0, %s39
    %s41 = sphi 0, %s39
    %s42 = sphi 0, %s41
    %s56 = sphi 0, %s42
    %s60 = sphi 0, %s60
    %s62 = sphi 0, %s60
    %s63 = sphi 0, %s62
    %s77 = sphi 0, %s63
    %s81 = sphi 0, %s81
    %s83 = sphi 0, %s81
    %s84 = sphi 0, %s83
    %s98 = sphi 0, %s84
    %s104 = sphi 0, %s106
    %s107 = sphi 0, %s104
    %s108 = sphi 0, %s107
    %s124 = sphi 0, %s108
  $region4: #{temporal_conv_layer.1} parent=0 // loop_header_branch
    %13 = sbr.rel (%p11) target = $region8
  $region5: #{temporal_conv_layer.1} parent=0 // loop_body
    %s15 = ssub.s32 %s10, 1
    %s16 = ssub.s32 %s10, 2
    %s17 = sadd.s32 %s10, 1
    %s19 = sadd.s32 %s18, 1
    %p22 = scmp.eq.s32.totalorder %s10, 1
    %p23 = scmp.ne.s32.totalorder %s18, %s20
    %p24 = scmp.eq.s32.totalorder %s10, 0
    %p25 = por %p23, %p24
    %p26 = scmp.ne.s32.totalorder %s18, %s20
    %p27 = scmp.eq.s32.totalorder %s15, 1
    %p28 = por %p26, %p27
    %p29 = scmp.ne.s32.totalorder %s20, %s21
    %p30 = scmp.eq.s32.totalorder %s15, 0
    %p31 = por %p29, %p30
    %p32 = scmp.ne.s32.totalorder %s20, %s21
    %p33 = scmp.eq.s32.totalorder %s16, 1
    %p34 = por %p32, %p33
    %p36 = scmp.ne.s32.totalorder %s21, %s35
    %p37 = scmp.eq.s32.totalorder %s16, 0
    %p38 = por %p36, %p37
    %s40 = sadd.s32 %s39, 1
    %p43 = scmp.eq.s32.totalorder %s10, 1
    %p44 = scmp.ne.s32.totalorder %s39, %s41
    %p45 = scmp.eq.s32.totalorder %s10, 0
    %p46 = por %p44, %p45
    %p47 = scmp.ne.s32.totalorder %s39, %s41
    %p48 = scmp.eq.s32.totalorder %s15, 1
    %p49 = por %p47, %p48
    %p50 = scmp.ne.s32.totalorder %s41, %s42
    %p51 = scmp.eq.s32.totalorder %s15, 0
    %p52 = por %p50, %p51
    %p53 = scmp.ne.s32.totalorder %s41, %s42
    %p54 = scmp.eq.s32.totalorder %s16, 1
    %p55 = por %p53, %p54
    %p57 = scmp.ne.s32.totalorder %s42, %s56
    %p58 = scmp.eq.s32.totalorder %s16, 0
    %p59 = por %p57, %p58
    %s61 = sadd.s32 %s60, 1
    %p64 = scmp.eq.s32.totalorder %s10, 1
    %p65 = scmp.ne.s32.totalorder %s60, %s62
    %p66 = scmp.eq.s32.totalorder %s10, 0
    %p67 = por %p65, %p66
    %p68 = scmp.ne.s32.totalorder %s60, %s62
    %p69 = scmp.eq.s32.totalorder %s15, 1
    %p70 = por %p68, %p69
    %p71 = scmp.ne.s32.totalorder %s62, %s63
    %p72 = scmp.eq.s32.totalorder %s15, 0
    %p73 = por %p71, %p72
    %p74 = scmp.ne.s32.totalorder %s62, %s63
    %p75 = scmp.eq.s32.totalorder %s16, 1
    %p76 = por %p74, %p75
    %p78 = scmp.ne.s32.totalorder %s63, %s77
    %p79 = scmp.eq.s32.totalorder %s16, 0
    %p80 = por %p78, %p79
    %s82 = sadd.s32 %s81, 1
    %p85 = scmp.eq.s32.totalorder %s10, 1
    %p86 = scmp.ne.s32.totalorder %s81, %s83
    %p87 = scmp.eq.s32.totalorder %s10, 0
    %p88 = por %p86, %p87
    %p89 = scmp.ne.s32.totalorder %s81, %s83
    %p90 = scmp.eq.s32.totalorder %s15, 1
    %p91 = por %p89, %p90
    %p92 = scmp.ne.s32.totalorder %s83, %s84
    %p93 = scmp.eq.s32.totalorder %s15, 0
    %p94 = por %p92, %p93
    %p95 = scmp.ne.s32.totalorder %s83, %s84
    %p96 = scmp.eq.s32.totalorder %s16, 1
    %p97 = por %p95, %p96
    %p99 = scmp.ne.s32.totalorder %s84, %s98
    %p100 = scmp.eq.s32.totalorder %s16, 0
    %p101 = por %p99, %p100
    %s102 = ssub.s32 %s10, %s17
    %p103 = scmp.eq.s32.totalorder %s102, 0
    %s105 = sadd.s32 %s104, 1
    %s106 = scalar_select %p103, %s104, %s105
    %p109 = pneg %p103
    %p110 = scmp.eq.s32.totalorder %s10, 1
    %p111 = por %p109, %p110
    %p112 = scmp.ne.s32.totalorder %s104, %s107
    %p113 = scmp.eq.s32.totalorder %s10, 0
    %p114 = por %p112, %p113
    %p115 = scmp.ne.s32.totalorder %s104, %s107
    %p116 = scmp.eq.s32.totalorder %s15, 1
    %p117 = por %p115, %p116
    %p118 = scmp.ne.s32.totalorder %s107, %s108
    %p119 = scmp.eq.s32.totalorder %s15, 0
    %p120 = por %p118, %p119
    %p121 = scmp.ne.s32.totalorder %s107, %s108
    %p122 = scmp.eq.s32.totalorder %s16, 1
    %p123 = por %p121, %p122
    %p125 = scmp.ne.s32.totalorder %s108, %s124
    %p126 = scmp.eq.s32.totalorder %s16, 0
    %p127 = por %p125, %p126
    %p128 = scmp.le.s32.totalorder 1, %s10
    %p129 = scmp.lt.s32.totalorder %s10, 3
    %p130 = pnand %p128, %p129
    %p131 = pneg %p130
    // Predicated region
    $region9: #{temporal_conv_layer.1} parent=5 // pred_check
      _
    $region10: #{temporal_conv_layer.1} parent=5 // pred_check_branch
      %133 = sbr.rel (%p130) target = $region12
    $region11: #{temporal_conv_layer.1} parent=5 // pred_region
      %s134 = ssub.s32 %s10, 1
      // Predicated region
      $region13: #{temporal_conv_layer.1} parent=11 // pred_check
        %p135 = pneg %p31
      $region14: #{temporal_conv_layer.1} parent=11 // pred_check_branch
        %137 = sbr.rel (%p135) target = $region16
      $region15: #{temporal_conv_layer.1} parent=11 // pred_region
        _
      $region16: #{temporal_conv_layer.1} parent=11 // pred_fallthru
        _
      // Predicated region
      $region17: #{temporal_conv_layer.1} parent=11 // pred_check
        %p138 = pneg %p52
      $region18: #{temporal_conv_layer.1} parent=11 // pred_check_branch
        %140 = sbr.rel (%p138) target = $region20
      $region19: #{temporal_conv_layer.1} parent=11 // pred_region
        _
      $region20: #{temporal_conv_layer.1} parent=11 // pred_fallthru
        _
      // Predicated region
      $region21: #{temporal_conv_layer.1} parent=11 // pred_check
        %p141 = pneg %p73
      $region22: #{temporal_conv_layer.1} parent=11 // pred_check_branch
        %143 = sbr.rel (%p141) target = $region24
      $region23: #{temporal_conv_layer.1} parent=11 // pred_region
        _
      $region24: #{temporal_conv_layer.1} parent=11 // pred_fallthru
        _
      // Predicated region
      $region25: #{temporal_conv_layer.1} parent=11 // pred_check
        %p144 = pneg %p94
      $region26: #{temporal_conv_layer.1} parent=11 // pred_check_branch
        %146 = sbr.rel (%p144) target = $region28
      $region27: #{temporal_conv_layer.1} parent=11 // pred_region
        _
      $region28: #{temporal_conv_layer.1} parent=11 // pred_fallthru
        _
    $region12: #{temporal_conv_layer.1} parent=5 // pred_fallthru
      _
    %p147 = scmp.lt.s32.totalorder %s10, 2
    // Predicated region
    $region29: #{temporal_conv_layer.1} parent=5 // pred_check
      %p148 = pneg %p147
    $region30: #{temporal_conv_layer.1} parent=5 // pred_check_branch
      %150 = sbr.rel (%p148) target = $region32
    $region31: #{temporal_conv_layer.1} parent=5 // pred_region
      _
    $region32: #{temporal_conv_layer.1} parent=5 // pred_fallthru
      _
    %p151 = scmp.le.s32.totalorder 1, %s10
    %p152 = scmp.lt.s32.totalorder %s10, 3
    %p153 = pnand %p151, %p152
    %p154 = pneg %p153
    // Predicated region
    $region33: #{temporal_conv_layer.1} parent=5 // pred_check
      _
    $region34: #{temporal_conv_layer.1} parent=5 // pred_check_branch
      %156 = sbr.rel (%p153) target = $region36
    $region35: #{temporal_conv_layer.1} parent=5 // pred_region
      %s157 = ssub.s32 %s10, 1
      %p158 = pneg %p31
      %p159 = pneg %p28
      %p160 = pneg %p52
      %p161 = pneg %p49
      %p162 = pneg %p73
      %p163 = pneg %p70
      %p164 = pneg %p94
      %p165 = pneg %p91
      %p166 = pneg %p120
      %p167 = pneg %p117
      %s168 = smul.u32 4, %s15
      %p169 = scmp.lt.s32.totalorder %s168, 7
      %s170 = scalar_select %p169, %s168, 7
      %s171 = smul.addr %s170, 8
      %s172 = scalar_lea.vmem %s4, %s171
      %s173 = smul.u32 4, %s15
      %p174 = scmp.lt.s32.totalorder %s173, 7
      %s175 = scalar_select %p174, %s173, 7
      %s176 = smul.addr %s175, 8
      %s177 = scalar_lea.vmem %s4, %s176
      %s178 = smul.u32 4, %s15
      %s179 = smul.u32 %s15, 32
      %s180 = sadd.s32 %s179, 8
      %s181 = scalar_lea.vmem %s0, %s179
      %v182 = vld [vmem:[%s181] sm:$0xff]
      %v183 = vld [vmem:[%s181 + $0x8] sm:$0xff]
      %v184 = vld [vmem:[%s181 + $0x10] sm:$0xff]
      %v185 = vld [vmem:[%s181 + $0x18] sm:$0xff]
      %s186 = scalar_lea.vmem %s0, %s180
      %v187 = vld [vmem:[%s186] sm:$0xff]
      %v188 = vld [vmem:[%s186 + $0x8] sm:$0xff]
      %v189 = vld [vmem:[%s186 + $0x10] sm:$0xff]
      %v190 = vld [vmem:[%s186 + $0x18] sm:$0xff]
      %v191 = vld [vmem:[%s1] sm:$0xff]
      %v192 = vld [vmem:[%s1 + $0x8] sm:$0xff]
      %v193 = vld [vmem:[%s2] sm:$0xff]
      %v194 = vld [vmem:[%s2 + $0x8] sm:$0xff]
      %vm195 = vcmask 130048
      %v197 = vsel %vm195, %v187, 0
      %v200 = vsel %vm195, %v188, 0
      %v203 = vsel %vm195, %v189, 0
      %v206 = vsel %vm195, %v190, 0
      %208 = vmatpush.msra.mxu0 0.0
      %209 = vmatpush.msra.mxu0 0.0
      %210 = vmatpush.msra.mxu0 0.0
      %211 = vmatpush.msra.mxu0 0.0
      %212 = vmatpush.msra.mxu0 0.0
      %213 = vmatpush.msra.mxu0 0.0
      %214 = vmatpush.msra.mxu0 0.0
      %215 = vmatpush.msra.mxu0 0.0
      %216 = vmatpush.msra.mxu0 0.0
      %217 = vmatpush.msra.mxu0 0.0
      %218 = vmatpush.msra.mxu0 0.0
      %219 = vmatpush.msra.mxu0 0.0
      %220 = vmatpush.msra.mxu0 0.0
      %221 = vmatpush.msra.mxu0 0.0
      %222 = vmatpush.msra.mxu0 %v194
      %223 = vmatpush.msra.mxu0 %v193
      %224 = vmatmul.f32.gmra.mxu0 %v197
      %v225 = vpop.f32.mrf.mxu0
      %v226 = vadd.f32 0.0, %v225
      %227 = vmatmul.f32.gmra.mxu0 %v200
      %v228 = vpop.f32.mrf.mxu0
      %v229 = vadd.f32 0.0, %v228
      %230 = vmatmul.f32.gmra.mxu0 %v203
      %v231 = vpop.f32.mrf.mxu0
      %v232 = vadd.f32 0.0, %v231
      %233 = vmatmul.f32.gmra.mxu0 %v206
      %v234 = vpop.f32.mrf.mxu0
      %v235 = vadd.f32 0.0, %v234
      %236 = vdwg.mxu0
      %v238 = vsel %vm195, %v182, 0
      %v241 = vsel %vm195, %v183, 0
      %v244 = vsel %vm195, %v184, 0
      %v247 = vsel %vm195, %v185, 0
      %249 = vmatpush.msra.mxu0 0.0
      %250 = vmatpush.msra.mxu0 0.0
      %251 = vmatpush.msra.mxu0 0.0
      %252 = vmatpush.msra.mxu0 0.0
      %253 = vmatpush.msra.mxu0 0.0
      %254 = vmatpush.msra.mxu0 0.0
      %255 = vmatpush.msra.mxu0 0.0
      %256 = vmatpush.msra.mxu0 0.0
      %257 = vmatpush.msra.mxu0 0.0
      %258 = vmatpush.msra.mxu0 0.0
      %259 = vmatpush.msra.mxu0 0.0
      %260 = vmatpush.msra.mxu0 0.0
      %261 = vmatpush.msra.mxu0 0.0
      %262 = vmatpush.msra.mxu0 0.0
      %263 = vmatpush.msra.mxu0 %v192
      %264 = vmatpush.msra.mxu0 %v191
      %265 = vmatmul.f32.gmra.mxu0 %v238
      %v266 = vpop.f32.mrf.mxu0
      %v267 = vadd.f32 %v226, %v266
      %268 = vmatmul.f32.gmra.mxu0 %v241
      %v269 = vpop.f32.mrf.mxu0
      %v270 = vadd.f32 %v229, %v269
      %271 = vmatmul.f32.gmra.mxu0 %v244
      %v272 = vpop.f32.mrf.mxu0
      %v273 = vadd.f32 %v232, %v272
      %274 = vmatmul.f32.gmra.mxu0 %v247
      %v275 = vpop.f32.mrf.mxu0
      %v276 = vadd.f32 %v235, %v275
      %277 = vdwg.mxu0
      %v278 = vld [vmem:[%s3] sm:$0x1]
      %v280 = vperm.slane %v278, 0
      %v282 = vadd.f32 %v267, %v280
      %v283 = vadd.f32 %v270, %v280
      %v284 = vadd.f32 %v273, %v280
      %v285 = vadd.f32 %v276, %v280
      %v286 = vmax.f32 %v282, 0.0
      %v287 = vmax.f32 %v283, 0.0
      %v288 = vmax.f32 %v284, 0.0
      %v289 = vmax.f32 %v285, 0.0
      %290 = vst [vmem:[%s177] sm:$0xff] %v286
      %291 = vst [vmem:[%s177 + $0x8] sm:$0xff] %v287
      %292 = vst [vmem:[%s177 + $0x10] sm:$0xff] %v288
      %293 = vst [vmem:[%s177 + $0x18] sm:$0xff] %v289
      %s294 = smul.u32 4, %s15
      %p295 = scmp.lt.s32.totalorder %s294, 7
      %s296 = scalar_select %p295, %s294, 7
      %s297 = smul.addr %s296, 8
      %s298 = scalar_lea.vmem %s4, %s297
      // Predicated region
      $region37: #{temporal_conv_layer.1} parent=35 // pred_check
        %p299 = pneg %p117
      $region38: #{temporal_conv_layer.1} parent=35 // pred_check_branch
        %301 = sbr.rel (%p299) target = $region40
      $region39: #{temporal_conv_layer.1} parent=35 // pred_region
        %s302 = smul.u32 4, %s15
      $region40: #{temporal_conv_layer.1} parent=35 // pred_fallthru
        _
    $region36: #{temporal_conv_layer.1} parent=5 // pred_fallthru
      _
    %p303 = scmp.le.s32.totalorder 2, %s10
    // Predicated region
    $region41: #{temporal_conv_layer.1} parent=5 // pred_check
      %p304 = pneg %p303
    $region42: #{temporal_conv_layer.1} parent=5 // pred_check_branch
      %306 = sbr.rel (%p304) target = $region44
    $region43: #{temporal_conv_layer.1} parent=5 // pred_region
      %s307 = ssub.s32 %s10, 2
      // Predicated region
      $region45: #{temporal_conv_layer.1} parent=43 // pred_check
        %p308 = pneg %p123
      $region46: #{temporal_conv_layer.1} parent=43 // pred_check_branch
        %310 = sbr.rel (%p308) target = $region48
      $region47: #{temporal_conv_layer.1} parent=43 // pred_region
        %s311 = smul.u32 4, %s16
        %p312 = scmp.lt.s32.totalorder %s311, 7
        %s313 = scalar_select %p312, %s311, 7
        %s314 = smul.addr %s313, 8
        %s315 = scalar_lea.vmem %s4, %s314
      $region48: #{temporal_conv_layer.1} parent=43 // pred_fallthru
        _
    $region44: #{temporal_conv_layer.1} parent=5 // pred_fallthru
      _
  $region6: #{temporal_conv_layer.1} parent=0 // loop_footer
    %s14 = sadd.s32 1, %s10
  $region7: #{temporal_conv_layer.1} parent=0 // loop_footer_branch
    %9 = sbr.rel target = $region3
  $region8: #{temporal_conv_layer.1} parent=0 // loop_exit
    _

</llo_original>
